<compile_context>
chip_gen: v7x
topology: tpu7x:2x2x1
jax: 0.10.0
libtpu: 0.0.40
codegen_flags: <defaults>
</compile_context>

<pallas_src>
import jax
import jax.numpy as jnp
import numpy as np
from jax.experimental import pallas as pl
from jax.experimental.pallas import tpu as pltpu

EPS = 1e-5
_VMEM_LIMIT = 48 * 1024 * 1024   # fits v7x's 64 MiB physical VMEM with headroom


# --------------------------------------------------------------------------- kernels
def _stats_kernel(x_ref, w_ref, sum_ref, ssq_ref):
    """Pass 1: conv tile (4 candidates) -> per-channel partial sum / sum-of-squares."""
    x = x_ref[0]                                          # (Mt, 16*Cin) bf16
    s = None
    ss = None
    for k in range(4):                                    # 4 pool candidates
        acc = jnp.dot(x, w_ref[k], preferred_element_type=jnp.float32)  # (Mt, Coutp)
        ps = jnp.sum(acc, axis=0, keepdims=True)          # (1, Coutp)
        pss = jnp.sum(acc * acc, axis=0, keepdims=True)
        s = ps if s is None else s + ps
        ss = pss if ss is None else ss + pss
    sum_ref[0, 0] = s
    ssq_ref[0, 0] = ss


def _pool_kernel(x_ref, w_ref, scale_ref, shift_ref, out_ref, code_ref):
    """Pass 2: conv tile -> BN(affine) -> ReLU -> 2x2 max-pool + argmax candidate code."""
    x = x_ref[0]                                          # (Mt, 16*Cin) bf16
    scale = scale_ref[...]                                # (1, Coutp) f32
    shift = shift_ref[...]                                # (1, Coutp) f32

    def cand(k):
        acc = jnp.dot(x, w_ref[k], preferred_element_type=jnp.float32)  # (Mt, Coutp)
        return jnp.maximum(acc * scale + shift, 0.0)

    m = cand(0)
    code = jnp.zeros(m.shape, jnp.int32)
    for k in (1, 2, 3):                                   # raster order (0,0)(0,1)(1,0)(1,1)
        y = cand(k)
        take = y > m                                      # strict '>' keeps first max on ties
        code = jnp.where(take, k, code)
        m = jnp.maximum(m, y)
    out_ref[0] = m
    code_ref[0] = code.astype(jnp.int8)


# --------------------------------------------------------------------------- wrapper
def _pick_tile_rows(Ho, Wo, target_rows):
    """Largest THo | Ho with THo*Wo <= target and THo*Wo % 32 == 0 (int8 tile-aligned)."""
    best = None
    for d in range(1, Ho + 1):
        if Ho % d:
            continue
        m = d * Wo
        if m <= target_rows and m % 32 == 0:
            best = d
    return best if best is not None else Ho   # full-dim block => (8,128) exemption


def downblock_forward(x_nchw, weight, bias, gamma, beta, *, target_rows=1024):
    """DownBlock forward ('regular' branch, x.shape[0] != 3).

    x_nchw : (N, Cin, H, W) f32;  weight : (Cout, Cin, 3, 3);  bias/gamma/beta : (Cout,)
    Returns (out NCHW (N, Cout, H//2, W//2) f32,
             pool indices NCHW int32 -- PyTorch uses int64; int32 kept on TPU).
    In the original module the indices go to self.decode.put(indices); they are
    simply returned here.
    """
    del bias  # exactly cancelled by the BatchNorm mean subtraction

    N, Cin, H, W = x_nchw.shape
    if H % 2 or W % 2:
        raise ValueError("DownBlock kernel assumes even H and W")
    Cout = weight.shape[0]
    Ho, Wo = H // 2, W // 2
    Coutp = ((Cout + 127) // 128) * 128              # lane-dense output channels
    C16 = 16 * Cin
    THo = _pick_tile_rows(Ho, Wo, target_rows)
    Mt = THo * Wo
    T = Ho // THo
    P = Ho * Wo

    # ---- glue: NCHW -> NHWC, zero pad, 4x4 space-to-depth, bf16 ------------------
    xh = jnp.transpose(x_nchw, (0, 2, 3, 1)).astype(jnp.float32)   # (N, H, W, Cin)
    xp = jnp.pad(xh, ((0, 0), (1, 1), (1, 1), (0, 0)))             # (N, H+2, W+2, Cin)
    shifts = []
    for a in range(4):
        for b in range(4):
            shifts.append(xp[:, a:a + 2 * Ho:2, b:b + 2 * Wo:2, :])  # (N, Ho, Wo, Cin)
    xv = jnp.concatenate(shifts, axis=-1)                          # (N, Ho, Wo, 16*Cin)
    xv = xv.reshape(N, P, C16).astype(jnp.bfloat16)

    # structured-sparse per-candidate weights: wv[k=(py*2+px), (a*4+b)*Cin+c, o]
    wt = jnp.transpose(weight, (2, 3, 1, 0)).astype(jnp.float32)   # (3, 3, Cin, Cout)
    wk_list = []
    for py in range(2):
        for px in range(2):
            blocks = []
            for a in range(4):
                for b in range(4):
                    dy, dx = a - py, b - px
                    if 0 <= dy <= 2 and 0 <= dx <= 2:
                        blocks.append(wt[dy, dx])
                    else:
                        blocks.append(jnp.zeros((Cin, Cout), jnp.float32))
            wk_list.append(jnp.concatenate(blocks, axis=0))        # (16*Cin, Cout)
    wv = jnp.stack(wk_list, axis=0)                                # (4, 16*Cin, Cout)
    wv = jnp.pad(wv, ((0, 0), (0, 0), (0, Coutp - Cout))).astype(jnp.bfloat16)

    cparams = pltpu.CompilerParams(dimension_semantics=("parallel", "parallel"),
                                   vmem_limit_bytes=_VMEM_LIMIT)

    # ---- pass 1: per-tile BatchNorm partial statistics ---------------------------
    psum, pssq = pl.pallas_call(
        _stats_kernel,
        out_shape=(jax.ShapeDtypeStruct((N, T, 1, Coutp), jnp.float32),
                   jax.ShapeDtypeStruct((N, T, 1, Coutp), jnp.float32)),
        grid=(N, T),
        in_specs=[pl.BlockSpec((1, Mt, C16), lambda n, t: (n, t, 0)),
                  pl.BlockSpec((4, C16, Coutp), lambda n, t: (0, 0, 0))],
        out_specs=(pl.BlockSpec((1, 1, 1, Coutp), lambda n, t: (n, t, 0, 0)),
                   pl.BlockSpec((1, 1, 1, Coutp), lambda n, t: (n, t, 0, 0))),
        compiler_params=cparams,
    )(xv, wv)

    cnt = float(4 * N * P)                                         # = N*H*W elements/channel
    tot = jnp.sum(psum, axis=(0, 1, 2)) / cnt                      # mean      (Coutp,)
    tot2 = jnp.sum(pssq, axis=(0, 1, 2)) / cnt
    var = jnp.maximum(tot2 - tot * tot, 0.0)
    gamma_p = jnp.pad(gamma.astype(jnp.float32), (0, Coutp - Cout))
    beta_p = jnp.pad(beta.astype(jnp.float32), (0, Coutp - Cout))
    scale = (gamma_p * jax.lax.rsqrt(var + EPS)).reshape(1, Coutp)
    shift = (beta_p - tot * scale[0]).reshape(1, Coutp)

    # ---- pass 2: conv -> BN -> ReLU -> max-pool (+ candidate code) ---------------
    out_v, code_v = pl.pallas_call(
        _pool_kernel,
        out_shape=(jax.ShapeDtypeStruct((N, P, Coutp), jnp.float32),
                   jax.ShapeDtypeStruct((N, P, Coutp), jnp.int8)),
        grid=(N, T),
        in_specs=[pl.BlockSpec((1, Mt, C16), lambda n, t: (n, t, 0)),
                  pl.BlockSpec((4, C16, Coutp), lambda n, t: (0, 0, 0)),
                  pl.BlockSpec((1, Coutp), lambda n, t: (0, 0)),
                  pl.BlockSpec((1, Coutp), lambda n, t: (0, 0))],
        out_specs=(pl.BlockSpec((1, Mt, Coutp), lambda n, t: (n, t, 0)),
                   pl.BlockSpec((1, Mt, Coutp), lambda n, t: (n, t, 0))),
        compiler_params=cparams,
    )(xv, wv, scale, shift)

    # ---- glue: un-pad channels, rebuild PyTorch-style flat H*W pool indices ------
    out_nchw = jnp.transpose(out_v.reshape(N, Ho, Wo, Coutp)[..., :Cout], (0, 3, 1, 2))
    code = jnp.transpose(code_v.reshape(N, Ho, Wo, Coutp)[..., :Cout].astype(jnp.int32),
                         (0, 3, 1, 2))                             # (N, Cout, Ho, Wo)
    ho_i = jax.lax.broadcasted_iota(jnp.int32, code.shape, 2)
    wo_i = jax.lax.broadcasted_iota(jnp.int32, code.shape, 3)
    idx_nchw = (2 * ho_i + code // 2) * W + (2 * wo_i + code % 2)
    return out_nchw, idx_nchw


# --------------------------------------------------------------------------- test
if __name__ == "__main__":
    key = jax.random.PRNGKey(0)
    kx, kw, kb, kg, kbe = jax.random.split(key, 5)
    N, Cin, H, W, Cout = 2, 4, 16, 16, 8
    Ho, Wo = H // 2, W // 2

    x = jax.random.normal(kx, (N, Cin, H, W), jnp.float32)
    weight = 0.2 * jax.random.normal(kw, (Cout, Cin, 3, 3), jnp.float32)
    bias = 0.1 * jax.random.normal(kb, (Cout,), jnp.float32)
    gamma = 1.0 + 0.1 * jax.random.normal(kg, (Cout,), jnp.float32)
    beta = 0.1 * jax.random.normal(kbe, (Cout,), jnp.float32)

    # small tile target so the demo exercises multi-tile pipelining (THo=4, T=2)
    out, idx = downblock_forward(x, weight, bias, gamma, beta, target_rows=32)
    out = jax.block_until_ready(out)
    idx = jax.block_until_ready(idx)

    # --- pure-JAX reference (same bf16 rounding of the streamed operands) ---------
    xq = x.astype(jnp.bfloat16).astype(jnp.float32)
    wq = weight.astype(jnp.bfloat16).astype(jnp.float32)
    conv = jax.lax.conv_general_dilated(
        xq, wq, (1, 1), ((1, 1), (1, 1)),
        dimension_numbers=("NCHW", "OIHW", "NCHW")) + bias[None, :, None, None]
    mu = conv.mean(axis=(0, 2, 3), keepdims=True)
    var = ((conv - mu) ** 2).mean(axis=(0, 2, 3), keepdims=True)
    yn = (conv - mu) * (gamma[None, :, None, None] * jax.lax.rsqrt(var + EPS)) \
        + beta[None, :, None, None]
    yn = jnp.maximum(yn, 0.0)
    cand = yn.reshape(N, Cout, Ho, 2, Wo, 2).transpose(0, 1, 2, 4, 3, 5)
    cand = cand.reshape(N, Cout, Ho, Wo, 4)
    ref_out = cand.max(-1)

    # pooled values
    np.testing.assert_allclose(np.asarray(out), np.asarray(ref_out),
                               atol=2e-3, rtol=2e-3)

    # indices: must lie in the correct 2x2 window and point at a maximal element
    idx_np = np.asarray(idx)
    r, c = idx_np // W, idx_np % W
    ho_g = np.arange(Ho)[None, None, :, None]
    wo_g = np.arange(Wo)[None, None, None, :]
    assert np.all(r // 2 == ho_g), "pool index outside its 2x2 window (rows)"
    assert np.all(c // 2 == wo_g), "pool index outside its 2x2 window (cols)"
    yn_np = np.asarray(yn).reshape(N, Cout, H * W)
    gathered = np.take_along_axis(yn_np, idx_np.reshape(N, Cout, Ho * Wo),
                                  axis=-1).reshape(N, Cout, Ho, Wo)
    np.testing.assert_allclose(gathered, np.asarray(ref_out), atol=2e-3, rtol=2e-3)

    print("KERNEL_OK")
</pallas_src>

<mosaic_0001>
module attributes {stable_mosaic.version = 11 : i64} {
  func.func @_stats_kernel(%arg0: i32, %arg1: i32, %arg2: memref<1x32x64xbf16, #tpu.memory_space<vmem>>, %arg3: memref<4x64x128xbf16, #tpu.memory_space<vmem>>, %arg4: memref<1x1x1x128xf32, #tpu.memory_space<vmem>>, %arg5: memref<1x1x1x128xf32, #tpu.memory_space<vmem>>) attributes {dimension_semantics = [#tpu.dimension_semantics<parallel>, #tpu.dimension_semantics<parallel>], iteration_bounds = array<i64: 2, 2>, scalar_prefetch = 0 : i64, scratch_operands = 0 : i64, tpu.core_type = #tpu.core_type<tc>, window_params = [{transform_indices = @transform_0, window_bounds = array<i64: 1, 32, 64>}, {pipeline_mode = #tpu.pipeline_mode<synchronous>, transform_indices = @transform_1, window_bounds = array<i64: 4, 64, 128>}, {transform_indices = @transform_2, window_bounds = array<i64: 1, 1, 1, 128>}, {transform_indices = @transform_3, window_bounds = array<i64: 1, 1, 1, 128>}]} {
    %c0 = arith.constant 0 : index
    %c0_0 = arith.constant 0 : index
    %c0_1 = arith.constant 0 : index
    %0 = vector.load %arg2[%c0, %c0_0, %c0_1] : memref<1x32x64xbf16, #tpu.memory_space<vmem>>, vector<1x32x64xbf16>
    %1 = vector.shape_cast %0 : vector<1x32x64xbf16> to vector<32x64xbf16>
    %c0_2 = arith.constant 0 : index
    %c0_3 = arith.constant 0 : index
    %c0_4 = arith.constant 0 : index
    %2 = vector.load %arg3[%c0_2, %c0_3, %c0_4] : memref<4x64x128xbf16, #tpu.memory_space<vmem>>, vector<1x64x128xbf16>
    %3 = vector.shape_cast %2 : vector<1x64x128xbf16> to vector<64x128xbf16>
    %cst = arith.constant dense<0.000000e+00> : vector<32x128xf32>
    %4 = tpu.matmul %1, %3, %cst {dimension_numbers = #tpu.dot_dimension_numbers<[1], [0], [0], [1], [0, 0, 1, 1], [], []>} : vector<32x64xbf16>, vector<64x128xbf16>, vector<32x128xf32> -> vector<32x128xf32>
    %cst_5 = arith.constant dense<0.000000e+00> : vector<128xf32>
    %5 = vector.multi_reduction <add>, %4, %cst_5 [0] : vector<32x128xf32> to vector<128xf32>
    %6 = vector.shape_cast %5 : vector<128xf32> to vector<1x128xf32>
    %7 = arith.mulf %4, %4 : vector<32x128xf32>
    %cst_6 = arith.constant dense<0.000000e+00> : vector<128xf32>
    %8 = vector.multi_reduction <add>, %7, %cst_6 [0] : vector<32x128xf32> to vector<128xf32>
    %9 = vector.shape_cast %8 : vector<128xf32> to vector<1x128xf32>
    %c1 = arith.constant 1 : index
    %c0_7 = arith.constant 0 : index
    %c0_8 = arith.constant 0 : index
    %10 = vector.load %arg3[%c1, %c0_7, %c0_8] : memref<4x64x128xbf16, #tpu.memory_space<vmem>>, vector<1x64x128xbf16>
    %11 = vector.shape_cast %10 : vector<1x64x128xbf16> to vector<64x128xbf16>
    %cst_9 = arith.constant dense<0.000000e+00> : vector<32x128xf32>
    %12 = tpu.matmul %1, %11, %cst_9 {dimension_numbers = #tpu.dot_dimension_numbers<[1], [0], [0], [1], [0, 0, 1, 1], [], []>} : vector<32x64xbf16>, vector<64x128xbf16>, vector<32x128xf32> -> vector<32x128xf32>
    %cst_10 = arith.constant dense<0.000000e+00> : vector<128xf32>
    %13 = vector.multi_reduction <add>, %12, %cst_10 [0] : vector<32x128xf32> to vector<128xf32>
    %14 = vector.shape_cast %13 : vector<128xf32> to vector<1x128xf32>
    %15 = arith.mulf %12, %12 : vector<32x128xf32>
    %cst_11 = arith.constant dense<0.000000e+00> : vector<128xf32>
    %16 = vector.multi_reduction <add>, %15, %cst_11 [0] : vector<32x128xf32> to vector<128xf32>
    %17 = vector.shape_cast %16 : vector<128xf32> to vector<1x128xf32>
    %18 = arith.addf %6, %14 : vector<1x128xf32>
    %19 = arith.addf %9, %17 : vector<1x128xf32>
    %c2 = arith.constant 2 : index
    %c0_12 = arith.constant 0 : index
    %c0_13 = arith.constant 0 : index
    %20 = vector.load %arg3[%c2, %c0_12, %c0_13] : memref<4x64x128xbf16, #tpu.memory_space<vmem>>, vector<1x64x128xbf16>
    %21 = vector.shape_cast %20 : vector<1x64x128xbf16> to vector<64x128xbf16>
    %cst_14 = arith.constant dense<0.000000e+00> : vector<32x128xf32>
    %22 = tpu.matmul %1, %21, %cst_14 {dimension_numbers = #tpu.dot_dimension_numbers<[1], [0], [0], [1], [0, 0, 1, 1], [], []>} : vector<32x64xbf16>, vector<64x128xbf16>, vector<32x128xf32> -> vector<32x128xf32>
    %cst_15 = arith.constant dense<0.000000e+00> : vector<128xf32>
    %23 = vector.multi_reduction <add>, %22, %cst_15 [0] : vector<32x128xf32> to vector<128xf32>
    %24 = vector.shape_cast %23 : vector<128xf32> to vector<1x128xf32>
    %25 = arith.mulf %22, %22 : vector<32x128xf32>
    %cst_16 = arith.constant dense<0.000000e+00> : vector<128xf32>
    %26 = vector.multi_reduction <add>, %25, %cst_16 [0] : vector<32x128xf32> to vector<128xf32>
    %27 = vector.shape_cast %26 : vector<128xf32> to vector<1x128xf32>
    %28 = arith.addf %18, %24 : vector<1x128xf32>
    %29 = arith.addf %19, %27 : vector<1x128xf32>
    %c3 = arith.constant 3 : index
    %c0_17 = arith.constant 0 : index
    %c0_18 = arith.constant 0 : index
    %30 = vector.load %arg3[%c3, %c0_17, %c0_18] : memref<4x64x128xbf16, #tpu.memory_space<vmem>>, vector<1x64x128xbf16>
    %31 = vector.shape_cast %30 : vector<1x64x128xbf16> to vector<64x128xbf16>
    %cst_19 = arith.constant dense<0.000000e+00> : vector<32x128xf32>
    %32 = tpu.matmul %1, %31, %cst_19 {dimension_numbers = #tpu.dot_dimension_numbers<[1], [0], [0], [1], [0, 0, 1, 1], [], []>} : vector<32x64xbf16>, vector<64x128xbf16>, vector<32x128xf32> -> vector<32x128xf32>
    %cst_20 = arith.constant dense<0.000000e+00> : vector<128xf32>
    %33 = vector.multi_reduction <add>, %32, %cst_20 [0] : vector<32x128xf32> to vector<128xf32>
    %34 = vector.shape_cast %33 : vector<128xf32> to vector<1x128xf32>
    %35 = arith.mulf %32, %32 : vector<32x128xf32>
    %cst_21 = arith.constant dense<0.000000e+00> : vector<128xf32>
    %36 = vector.multi_reduction <add>, %35, %cst_21 [0] : vector<32x128xf32> to vector<128xf32>
    %37 = vector.shape_cast %36 : vector<128xf32> to vector<1x128xf32>
    %38 = arith.addf %28, %34 : vector<1x128xf32>
    %39 = arith.addf %29, %37 : vector<1x128xf32>
    %c0_22 = arith.constant 0 : index
    %c0_23 = arith.constant 0 : index
    %c0_24 = arith.constant 0 : index
    %c0_25 = arith.constant 0 : index
    %40 = vector.load %arg4[%c0_22, %c0_23, %c0_24, %c0_25] : memref<1x1x1x128xf32, #tpu.memory_space<vmem>>, vector<1x1x1x128xf32>
    %41 = vector.shape_cast %40 : vector<1x1x1x128xf32> to vector<1x128xf32>
    %42 = vector.shape_cast %38 : vector<1x128xf32> to vector<1x1x1x128xf32>
    tpu.vector_store %arg4[%c0_22, %c0_23, %c0_24, %c0_25], %42 {strides = array<i32>} : memref<1x1x1x128xf32, #tpu.memory_space<vmem>>, vector<1x1x1x128xf32>,
    %c0_26 = arith.constant 0 : index
    %c0_27 = arith.constant 0 : index
    %c0_28 = arith.constant 0 : index
    %c0_29 = arith.constant 0 : index
    %43 = vector.load %arg5[%c0_26, %c0_27, %c0_28, %c0_29] : memref<1x1x1x128xf32, #tpu.memory_space<vmem>>, vector<1x1x1x128xf32>
    %44 = vector.shape_cast %43 : vector<1x1x1x128xf32> to vector<1x128xf32>
    %45 = vector.shape_cast %39 : vector<1x128xf32> to vector<1x1x1x128xf32>
    tpu.vector_store %arg5[%c0_26, %c0_27, %c0_28, %c0_29], %45 {strides = array<i32>} : memref<1x1x1x128xf32, #tpu.memory_space<vmem>>, vector<1x1x1x128xf32>,
    return
  }
  func.func @transform_0(%arg0: i32, %arg1: i32) -> (i32, i32, i32) {
    %c0_i32 = arith.constant 0 : i32
    %c0_i32_0 = arith.constant 0 : i32
    return %arg0, %arg1, %c0_i32 : i32, i32, i32
  }
  func.func @transform_1(%arg0: i32, %arg1: i32) -> (i32, i32, i32) {
    %c0_i32 = arith.constant 0 : i32
    %c0_i32_0 = arith.constant 0 : i32
    %c0_i32_1 = arith.constant 0 : i32
    %c0_i32_2 = arith.constant 0 : i32
    return %c0_i32, %c0_i32_0, %c0_i32_1 : i32, i32, i32
  }
  func.func @transform_2(%arg0: i32, %arg1: i32) -> (i32, i32, i32, i32) {
    %c0_i32 = arith.constant 0 : i32
    %c0_i32_0 = arith.constant 0 : i32
    %c0_i32_1 = arith.constant 0 : i32
    return %arg0, %arg1, %c0_i32, %c0_i32_0 : i32, i32, i32, i32
  }
  func.func @transform_3(%arg0: i32, %arg1: i32) -> (i32, i32, i32, i32) {
    %c0_i32 = arith.constant 0 : i32
    %c0_i32_0 = arith.constant 0 : i32
    %c0_i32_1 = arith.constant 0 : i32
    return %arg0, %arg1, %c0_i32, %c0_i32_0 : i32, i32, i32, i32
  }
}

</mosaic_0001>

<llo_original>
// kernel: tpu_custom_call.1
$region0: #{tpu_custom_call.1}
  #allocation0 [shape = 'u32[]', space=smem, size = 0x4, offset = 0x4, fixed_abs, tag = 'smem constant byte address 0x4 - core index']
  #allocation1 [shape = 'u32[144,128]{1,0:T(1,128)}', space=vmem, size = 0x12000, scoped, tag = 'internal scratch']
  %s0 = inlined_call_operand.hbm [shape: bf16[2,64,64], index: 0, kind: input, shape index: {}]
  %s1 = inlined_call_operand.hbm [shape: bf16[4,64,128], index: 1, kind: input, shape index: {}]
  %s2 = inlined_call_operand.hbm [shape: f32[2,2,1,128], index: 2, kind: output, shape index: {0}]
  %s3 = inlined_call_operand.hbm [shape: f32[2,2,1,128], index: 3, kind: output, shape index: {1}]
  %4 = xla_tuple %s2, %s3
  %s5 = sld [smem:[#allocation0]]
  $region57: #{tpu_custom_call.1} parent=0
    _
  %s7 = ssub.s32 1, %s5
  %s8 = scalar_select 0, %s7, %s5
  $region1: #{tpu_custom_call.1} parent=0
    #allocation2 [shape = 'u8[16384]{0}', space=vmem, size = 0x4000, scoped, tag = 'input window, operand 0']
    #allocation3 [shape = 's32[2]{0}', space=sflag, size = 0x8, scoped, tag = 'scoped memory for tpu_custom_call.1']
    #allocation4 [shape = 's32[2]{0}', space=sflag, size = 0x8, scoped, tag = 'scoped memory for tpu_custom_call.1']
    #allocation5 [shape = 'u8[65536]{0}', space=vmem, size = 0x10000, scoped, tag = 'input window, operand 1, single buffered']
    #allocation6 [shape = 's32[1]{0}', space=sflag, size = 0x4, scoped, tag = 'scoped memory for tpu_custom_call.1']
    #allocation7 [shape = 'u8[1024]{0}', space=vmem, size = 0x400, scoped, tag = 'output window, operand 0']
    #allocation8 [shape = 'u8[1024]{0}', space=vmem, size = 0x400, scoped, tag = 'output window, operand 1']
    #allocation9 [shape = 's32[2]{0}', space=sflag, size = 0x8, scoped, tag = 'scoped memory for tpu_custom_call.1']
    %9 = vsyncpa [#allocation3], 0
    %s10 = scalar_lea.sflag [#allocation3], 1
    %11 = vsyncpa %s10, 0
    %12 = vsyncpa [#allocation6], 0
    %13 = vsyncpa [#allocation4], 0
    %s14 = scalar_lea.sflag [#allocation4], 1
    %15 = vsyncpa %s14, 0
    %16 = vsyncpa [#allocation9], 0
    %s17 = scalar_lea.sflag [#allocation9], 1
    %18 = vsyncpa %s17, 0
    loop: start=0, step=1, limit=6
    $region2: #{tpu_custom_call.1} parent=1 // loop_pre_header
      _
    $region3: #{tpu_custom_call.1} parent=1 // loop_header
      %s20 = sphi 0, %s24
      %p21 = scmp.ge.s32.totalorder %s20, 6
      %s27 = sphi 0, %s39
      %s28 = sphi 0, %s35
      %s29 = sphi 0, %s27
      %s30 = sphi 0, %s28
      %s31 = sphi 0, %s29
      %s32 = sphi 0, %s30
      %s44 = sphi 0, %s46
      %s47 = sphi 0, %s44
      %s48 = sphi 0, %s47
      %s64 = sphi 0, %s48
      %s68 = sphi 0, %s68
      %s70 = sphi 0, %s68
      %s71 = sphi 0, %s70
      %s85 = sphi 0, %s71
      %s93 = sphi 0, %s95
      %s96 = sphi 0, %s93
      %s97 = sphi 0, %s96
      %s113 = sphi 0, %s97
      %s121 = sphi 0, %s123
      %s124 = sphi 0, %s121
      %s125 = sphi 0, %s124
      %s141 = sphi 0, %s125
    $region4: #{tpu_custom_call.1} parent=1 // loop_header_branch
      %23 = sbr.rel (%p21) target = $region8
    $region5: #{tpu_custom_call.1} parent=1 // loop_body
      %s25 = ssub.s32 %s20, 1
      %s26 = ssub.s32 %s20, 2
      %s33 = sadd.s32 1, %s28
      %p34 = scmp.ge.s32.totalorder %s33, 2
      %s35 = scalar_select %p34, 0, %s33
      %s36 = sadd.s32 1, %s27
      %s37 = scalar_select %p34, %s36, %s27
      %p38 = scmp.ge.s32.totalorder %s37, 2
      %s39 = scalar_select %p38, 0, %s37
      %s40 = ssub.s32 %s27, %s39
      %s41 = ssub.s32 %s28, %s35
      %s42 = sor.u32 %s40, %s41
      %p43 = scmp.eq.s32.totalorder %s42, 0
      %s45 = sadd.s32 %s44, 1
      %s46 = scalar_select %p43, %s44, %s45
      %p49 = pneg %p43
      %p50 = scmp.eq.s32.totalorder %s20, 3
      %p51 = por %p49, %p50
      %p52 = scmp.ne.s32.totalorder %s44, %s47
      %p53 = scmp.eq.s32.totalorder %s20, 0
      %p54 = por %p52, %p53
      %p55 = scmp.ne.s32.totalorder %s44, %s47
      %p56 = scmp.eq.s32.totalorder %s25, 3
      %p57 = por %p55, %p56
      %p58 = scmp.ne.s32.totalorder %s47, %s48
      %p59 = scmp.eq.s32.totalorder %s25, 0
      %p60 = por %p58, %p59
      %p61 = scmp.ne.s32.totalorder %s47, %s48
      %p62 = scmp.eq.s32.totalorder %s26, 3
      %p63 = por %p61, %p62
      %p65 = scmp.ne.s32.totalorder %s48, %s64
      %p66 = scmp.eq.s32.totalorder %s26, 0
      %p67 = por %p65, %p66
      %s69 = sadd.s32 %s68, 1
      %p72 = scmp.eq.s32.totalorder %s20, 3
      %p73 = scmp.ne.s32.totalorder %s68, %s70
      %p74 = scmp.eq.s32.totalorder %s20, 0
      %p75 = por %p73, %p74
      %p76 = scmp.ne.s32.totalorder %s68, %s70
      %p77 = scmp.eq.s32.totalorder %s25, 3
      %p78 = por %p76, %p77
      %p79 = scmp.ne.s32.totalorder %s70, %s71
      %p80 = scmp.eq.s32.totalorder %s25, 0
      %p81 = por %p79, %p80
      %p82 = scmp.ne.s32.totalorder %s70, %s71
      %p83 = scmp.eq.s32.totalorder %s26, 3
      %p84 = por %p82, %p83
      %p86 = scmp.ne.s32.totalorder %s71, %s85
      %p87 = scmp.eq.s32.totalorder %s26, 0
      %p88 = por %p86, %p87
      %s89 = ssub.s32 %s27, %s39
      %s90 = ssub.s32 %s28, %s35
      %s91 = sor.u32 %s89, %s90
      %p92 = scmp.eq.s32.totalorder %s91, 0
      %s94 = sadd.s32 %s93, 1
      %s95 = scalar_select %p92, %s93, %s94
      %p98 = pneg %p92
      %p99 = scmp.eq.s32.totalorder %s20, 3
      %p100 = por %p98, %p99
      %p101 = scmp.ne.s32.totalorder %s93, %s96
      %p102 = scmp.eq.s32.totalorder %s20, 0
      %p103 = por %p101, %p102
      %p104 = scmp.ne.s32.totalorder %s93, %s96
      %p105 = scmp.eq.s32.totalorder %s25, 3
      %p106 = por %p104, %p105
      %p107 = scmp.ne.s32.totalorder %s96, %s97
      %p108 = scmp.eq.s32.totalorder %s25, 0
      %p109 = por %p107, %p108
      %p110 = scmp.ne.s32.totalorder %s96, %s97
      %p111 = scmp.eq.s32.totalorder %s26, 3
      %p112 = por %p110, %p111
      %p114 = scmp.ne.s32.totalorder %s97, %s113
      %p115 = scmp.eq.s32.totalorder %s26, 0
      %p116 = por %p114, %p115
      %s117 = ssub.s32 %s27, %s39
      %s118 = ssub.s32 %s28, %s35
      %s119 = sor.u32 %s117, %s118
      %p120 = scmp.eq.s32.totalorder %s119, 0
      %s122 = sadd.s32 %s121, 1
      %s123 = scalar_select %p120, %s121, %s122
      %p126 = pneg %p120
      %p127 = scmp.eq.s32.totalorder %s20, 3
      %p128 = por %p126, %p127
      %p129 = scmp.ne.s32.totalorder %s121, %s124
      %p130 = scmp.eq.s32.totalorder %s20, 0
      %p131 = por %p129, %p130
      %p132 = scmp.ne.s32.totalorder %s121, %s124
      %p133 = scmp.eq.s32.totalorder %s25, 3
      %p134 = por %p132, %p133
      %p135 = scmp.ne.s32.totalorder %s124, %s125
      %p136 = scmp.eq.s32.totalorder %s25, 0
      %p137 = por %p135, %p136
      %p138 = scmp.ne.s32.totalorder %s124, %s125
      %p139 = scmp.eq.s32.totalorder %s26, 3
      %p140 = por %p138, %p139
      %p142 = scmp.ne.s32.totalorder %s125, %s141
      %p143 = scmp.eq.s32.totalorder %s26, 0
      %p144 = por %p142, %p143
      %p145 = scmp.le.s32.totalorder 1, %s20
      %p146 = scmp.lt.s32.totalorder %s20, 5
      %p147 = pnand %p145, %p146
      %p148 = pneg %p147
      // Predicated region
      $region9: #{tpu_custom_call.1} parent=5 // pred_check
        _
      $region10: #{tpu_custom_call.1} parent=5 // pred_check_branch
        %150 = sbr.rel (%p147) target = $region12
      $region11: #{tpu_custom_call.1} parent=5 // pred_region
        %s151 = ssub.s32 %s20, 1
        // Predicated region
        $region13: #{tpu_custom_call.1} parent=11 // pred_check
          %p152 = pneg %p81
        $region14: #{tpu_custom_call.1} parent=11 // pred_check_branch
          %154 = sbr.rel (%p152) target = $region16
        $region15: #{tpu_custom_call.1} parent=11 // pred_region
          %s156 = ssub.s32 2048, 2048
          %157 = vsyncadd [#allocation6], %s156
          %s158 = sshll.u32 [#allocation5], 4
          %s159 = int_to_ptr.vmem [resolvable:$true] %s158
          %164 = dma.hbm_to_vmem [thread:$0]  %s1, 2048, %s159, [#allocation6], 64, 64, 4
        $region16: #{tpu_custom_call.1} parent=11 // pred_fallthru
          _
      $region12: #{tpu_custom_call.1} parent=5 // pred_fallthru
        _
      %p165 = scmp.lt.s32.totalorder %s20, 4
      // Predicated region
      $region17: #{tpu_custom_call.1} parent=5 // pred_check
        %p166 = pneg %p165
      $region18: #{tpu_custom_call.1} parent=5 // pred_check_branch
        %168 = sbr.rel (%p166) target = $region20
      $region19: #{tpu_custom_call.1} parent=5 // pred_region
        // Predicated region
        $region21: #{tpu_custom_call.1} parent=19 // pred_check
          %p169 = pneg %p54
        $region22: #{tpu_custom_call.1} parent=19 // pred_check_branch
          %171 = sbr.rel (%p169) target = $region24
        $region23: #{tpu_custom_call.1} parent=19 // pred_region
          %s172 = sand.u32 %s44, 1
          %s173 = scalar_lea.sflag [#allocation3], %s172
          %s174 = sand.u32 %s44, 1
          %s175 = smul.addr %s174, 16
          %s176 = scalar_lea.vmem [#allocation2], %s175
          %s177 = smul.u32 4, %s28
          %s179 = ssub.s32 256, 256
          %180 = vsyncadd %s173, %s179
          %s181 = smul.addr %s27, 8
          %s182 = sadd.s32 %s177, %s181
          %s183 = smul.addr %s182, 64
          %s184 = scalar_lea.hbm %s0, %s183
          %s185 = sshll.u32 %s176, 4
          %s186 = int_to_ptr.vmem [resolvable:$true] %s185
          %191 = dma.hbm_to_vmem [thread:$0]  %s184, 256, %s186, %s173, 64, 64, 4
        $region24: #{tpu_custom_call.1} parent=19 // pred_fallthru
          _
      $region20: #{tpu_custom_call.1} parent=5 // pred_fallthru
        _
      %p192 = scmp.le.s32.totalorder 1, %s20
      %p193 = scmp.lt.s32.totalorder %s20, 5
      %p194 = pnand %p192, %p193
      %p195 = pneg %p194
      // Predicated region
      $region25: #{tpu_custom_call.1} parent=5 // pred_check
        _
      $region26: #{tpu_custom_call.1} parent=5 // pred_check_branch
        %197 = sbr.rel (%p194) target = $region28
      $region27: #{tpu_custom_call.1} parent=5 // pred_region
        %s198 = ssub.s32 %s20, 1
        %s199 = sand.u32 %s47, 1
        %s200 = scalar_lea.sflag [#allocation3], %s199
        %s201 = sand.u32 %s47, 1
        %s202 = smul.addr %s201, 16
        %s203 = scalar_lea.vmem [#allocation2], %s202
        // Predicated region
        $region29: #{tpu_custom_call.1} parent=27 // pred_check
          %p204 = pneg %p60
        $region30: #{tpu_custom_call.1} parent=27 // pred_check_branch
          %206 = sbr.rel (%p204) target = $region32
        $region31: #{tpu_custom_call.1} parent=27 // pred_region
          %207 = dma.done %s200, 256
        $region32: #{tpu_custom_call.1} parent=27 // pred_fallthru
          _
        // Predicated region
        $region33: #{tpu_custom_call.1} parent=27 // pred_check
          %p208 = pneg %p81
        $region34: #{tpu_custom_call.1} parent=27 // pred_check_branch
          %210 = sbr.rel (%p208) target = $region36
        $region35: #{tpu_custom_call.1} parent=27 // pred_region
          %211 = dma.done [#allocation6], 2048
        $region36: #{tpu_custom_call.1} parent=27 // pred_fallthru
          _
        %s212 = sand.u32 %s47, 1
        %s213 = scalar_lea.sflag [#allocation3], %s212
        %s214 = sand.u32 %s47, 1
        %s215 = smul.addr %s214, 16
        %s216 = scalar_lea.vmem [#allocation2], %s215
        %p217 = pneg %p60
        %p218 = pneg %p57
        %p219 = pneg %p81
        %p220 = pneg %p78
        %p221 = pneg %p109
        %p222 = pneg %p106
        %s223 = sand.u32 %s96, 1
        %s224 = scalar_lea.sflag [#allocation4], %s223
        %s225 = sand.u32 %s96, 1
        %s226 = scalar_lea.vmem [#allocation7], %s225
        %p227 = pneg %p137
        %p228 = pneg %p134
        %s229 = sand.u32 %s124, 1
        %s230 = scalar_lea.sflag [#allocation9], %s229
        %s231 = sand.u32 %s124, 1
        %s232 = scalar_lea.vmem [#allocation8], %s231
        %s233 = smul.u32 4, %s30
        %v235 = vld [vmem:[%s203] sm:$0xf]
        %v236 = vld [vmem:[%s203 + $0x4] sm:$0xf]
        %v237 = vld [vmem:[%s203 + $0x8] sm:$0xf]
        %v238 = vld [vmem:[%s203 + $0xc] sm:$0xf]
        %v239 = vld [vmem:[#allocation5] sm:$0xf]
        %v240 = vld [vmem:[#allocation5 + $0x4] sm:$0xf]
        %v241 = vld [vmem:[#allocation5 + $0x8] sm:$0xf]
        %v242 = vld [vmem:[#allocation5 + $0xc] sm:$0xf]
        %v243 = vld [vmem:[#allocation5 + $0x10] sm:$0xf]
        %v244 = vld [vmem:[#allocation5 + $0x14] sm:$0xf]
        %v245 = vld [vmem:[#allocation5 + $0x18] sm:$0xf]
        %v246 = vld [vmem:[#allocation5 + $0x1c] sm:$0xf]
        %v251 = vunpack.c.l.b16 %v235
        %v252 = vunpack.c.l.b16 %v236
        %v253 = vunpack.c.l.b16 %v237
        %v254 = vunpack.c.l.b16 %v238
        %v255 = vpack.c.b16 %v252, %v251
        %v256 = vpack.c.b16 %v254, %v253
        %v265 = vunpack.c.l.b16 %v239
        %v266 = vunpack.c.l.b16 %v240
        %v267 = vunpack.c.l.b16 %v241
        %v268 = vunpack.c.l.b16 %v242
        %v269 = vunpack.c.l.b16 %v243
        %v270 = vunpack.c.l.b16 %v244
        %v271 = vunpack.c.l.b16 %v245
        %v272 = vunpack.c.l.b16 %v246
        %v273 = vpack.c.b16 %v266, %v265
        %v274 = vpack.c.b16 %v268, %v267
        %v275 = vpack.c.b16 %v270, %v269
        %v276 = vpack.c.b16 %v272, %v271
        %vm281 = vcmask 523264
        %v283 = vsel %vm281, %v255, 0
        %v286 = vsel %vm281, %v256, 0
        %288 = vmatprep.subr.bf16.mxu0 0
        %289 = vmatpush1.bf16.msra.mxu0 %v273
        %290 = vmatprep.subr.bf16.mxu0 0
        %291 = vmatpush1.bf16.msra.mxu0 %v274
        %292 = vmatprep.subr.bf16.mxu0 0
        %293 = vmatpush1.bf16.msra.mxu0 %v275
        %294 = vmatprep.subr.bf16.mxu0 0
        %295 = vmatpush1.bf16.msra.mxu0 %v276
        %296 = vmatprep.subr.bf16.mxu0 0
        %297 = vmatpush1.bf16.msra.mxu0 0
        %298 = vmatprep.subr.bf16.mxu0 0
        %299 = vmatpush1.bf16.msra.mxu0 0
        %300 = vmatprep.subr.bf16.mxu0 0
        %301 = vmatpush1.bf16.msra.mxu0 0
        %302 = vmatprep.subr.bf16.mxu0 0
        %303 = vmatpush1.bf16.msra.mxu0 0
        %304 = vmatprep.subr.bf16.mxu0 0
        %305 = vmatpush1.bf16.msra.mxu0 0
        %306 = vmatprep.subr.bf16.mxu0 0
        %307 = vmatpush1.bf16.msra.mxu0 0
        %308 = vmatprep.subr.bf16.mxu0 0
        %309 = vmatpush1.bf16.msra.mxu0 0
        %310 = vmatprep.subr.bf16.mxu0 0
        %311 = vmatpush1.bf16.msra.mxu0 0
        %312 = vmatprep.subr.bf16.mxu0 0
        %313 = vmatpush1.bf16.msra.mxu0 0
        %314 = vmatprep.subr.bf16.mxu0 0
        %315 = vmatpush1.bf16.msra.mxu0 0
        %316 = vmatprep.subr.bf16.mxu0 0
        %317 = vmatpush1.bf16.msra.mxu0 0
        %318 = vmatprep.subr.bf16.mxu0 0
        %319 = vmatpush1.bf16.msra.mxu0 0
        %320 = vmatprep.mubr.bf16.mxu0 0
        %321 = vmatmul.mubr.bf16.gmra.mrb[0].mxu0 %v283
        %v322 = vpop.f32.mrb[0].mxu0
        %v323 = vadd.f32 0.0, %v322
        %v324 = vpop.f32.mrb[0].mxu0
        %v325 = vpop.f32.mrb[0].mxu0
        %v326 = vadd.f32 0.0, %v325
        %v327 = vpop.f32.mrb[0].mxu0
        %328 = vmatprep.mubr.bf16.mxu0 0
        %329 = vmatmul.mubr.bf16.gmra.mrb[0].mxu0 %v286
        %v330 = vpop.f32.mrb[0].mxu0
        %v331 = vadd.f32 0.0, %v330
        %v332 = vpop.f32.mrb[0].mxu0
        %v333 = vpop.f32.mrb[0].mxu0
        %v334 = vadd.f32 0.0, %v333
        %v335 = vpop.f32.mrb[0].mxu0
        %336 = vdwg.mxu0
        %v337 = vadd.f32 %v323, %v326
        %v338 = vadd.f32 %v337, %v331
        %v339 = vadd.f32 %v338, %v334
        %v340 = vrot.slane %v339, 4
        %v341 = vadd.f32 %v339, %v340
        %v342 = vrot.slane %v341, 2
        %v343 = vadd.f32 %v341, %v342
        %v344 = vrot.slane %v343, 1
        %v345 = vadd.f32 %v343, %v344
        %v346 = vmul.f32 %v323, %v323
        %v347 = vmul.f32 %v326, %v326
        %v348 = vmul.f32 %v331, %v331
        %v349 = vmul.f32 %v334, %v334
        %v350 = vadd.f32 %v346, %v347
        %v351 = vadd.f32 %v350, %v348
        %v352 = vadd.f32 %v351, %v349
        %v353 = vrot.slane %v352, 4
        %v354 = vadd.f32 %v352, %v353
        %v355 = vrot.slane %v354, 2
        %v356 = vadd.f32 %v354, %v355
        %v357 = vrot.slane %v356, 1
        %v358 = vadd.f32 %v356, %v357
        %s359 = scalar_lea.vmem [#allocation5], 32
        %v360 = vld [vmem:[%s359] sm:$0xf]
        %v361 = vld [vmem:[%s359 + $0x4] sm:$0xf]
        %v362 = vld [vmem:[%s359 + $0x8] sm:$0xf]
        %v363 = vld [vmem:[%s359 + $0xc] sm:$0xf]
        %v364 = vld [vmem:[%s359 + $0x10] sm:$0xf]
        %v365 = vld [vmem:[%s359 + $0x14] sm:$0xf]
        %v366 = vld [vmem:[%s359 + $0x18] sm:$0xf]
        %v367 = vld [vmem:[%s359 + $0x1c] sm:$0xf]
        %v376 = vunpack.c.l.b16 %v360
        %v377 = vunpack.c.l.b16 %v361
        %v378 = vunpack.c.l.b16 %v362
        %v379 = vunpack.c.l.b16 %v363
        %v380 = vunpack.c.l.b16 %v364
        %v381 = vunpack.c.l.b16 %v365
        %v382 = vunpack.c.l.b16 %v366
        %v383 = vunpack.c.l.b16 %v367
        %v384 = vpack.c.b16 %v377, %v376
        %v385 = vpack.c.b16 %v379, %v378
        %v386 = vpack.c.b16 %v381, %v380
        %v387 = vpack.c.b16 %v383, %v382
        %392 = vmatprep.subr.bf16.mxu0 0
        %393 = vmatpush1.bf16.msra.mxu0 %v384
        %394 = vmatprep.subr.bf16.mxu0 0
        %395 = vmatpush1.bf16.msra.mxu0 %v385
        %396 = vmatprep.subr.bf16.mxu0 0
        %397 = vmatpush1.bf16.msra.mxu0 %v386
        %398 = vmatprep.subr.bf16.mxu0 0
        %399 = vmatpush1.bf16.msra.mxu0 %v387
        %400 = vmatprep.subr.bf16.mxu0 0
        %401 = vmatpush1.bf16.msra.mxu0 0
        %402 = vmatprep.subr.bf16.mxu0 0
        %403 = vmatpush1.bf16.msra.mxu0 0
        %404 = vmatprep.subr.bf16.mxu0 0
        %405 = vmatpush1.bf16.msra.mxu0 0
        %406 = vmatprep.subr.bf16.mxu0 0
        %407 = vmatpush1.bf16.msra.mxu0 0
        %408 = vmatprep.subr.bf16.mxu0 0
        %409 = vmatpush1.bf16.msra.mxu0 0
        %410 = vmatprep.subr.bf16.mxu0 0
        %411 = vmatpush1.bf16.msra.mxu0 0
        %412 = vmatprep.subr.bf16.mxu0 0
        %413 = vmatpush1.bf16.msra.mxu0 0
        %414 = vmatprep.subr.bf16.mxu0 0
        %415 = vmatpush1.bf16.msra.mxu0 0
        %416 = vmatprep.subr.bf16.mxu0 0
        %417 = vmatpush1.bf16.msra.mxu0 0
        %418 = vmatprep.subr.bf16.mxu0 0
        %419 = vmatpush1.bf16.msra.mxu0 0
        %420 = vmatprep.subr.bf16.mxu0 0
        %421 = vmatpush1.bf16.msra.mxu0 0
        %422 = vmatprep.subr.bf16.mxu0 0
        %423 = vmatpush1.bf16.msra.mxu0 0
        %424 = vmatprep.mubr.bf16.mxu0 0
        %425 = vmatmul.mubr.bf16.gmra.mrb[0].mxu0 %v283
        %v426 = vpop.f32.mrb[0].mxu0
        %v427 = vadd.f32 0.0, %v426
        %v428 = vpop.f32.mrb[0].mxu0
        %v429 = vpop.f32.mrb[0].mxu0
        %v430 = vadd.f32 0.0, %v429
        %v431 = vpop.f32.mrb[0].mxu0
        %432 = vmatprep.mubr.bf16.mxu0 0
        %433 = vmatmul.mubr.bf16.gmra.mrb[0].mxu0 %v286
        %v434 = vpop.f32.mrb[0].mxu0
        %v435 = vadd.f32 0.0, %v434
        %v436 = vpop.f32.mrb[0].mxu0
        %v437 = vpop.f32.mrb[0].mxu0
        %v438 = vadd.f32 0.0, %v437
        %v439 = vpop.f32.mrb[0].mxu0
        %440 = vdwg.mxu0
        %v441 = vadd.f32 %v427, %v430
        %v442 = vadd.f32 %v441, %v435
        %v443 = vadd.f32 %v442, %v438
        %v444 = vrot.slane %v443, 4
        %v445 = vadd.f32 %v443, %v444
        %v446 = vrot.slane %v445, 2
        %v447 = vadd.f32 %v445, %v446
        %v448 = vrot.slane %v447, 1
        %v449 = vadd.f32 %v447, %v448
        %v450 = vmul.f32 %v427, %v427
        %v451 = vmul.f32 %v430, %v430
        %v452 = vmul.f32 %v435, %v435
        %v453 = vmul.f32 %v438, %v438
        %v454 = vadd.f32 %v450, %v451
        %v455 = vadd.f32 %v454, %v452
        %v456 = vadd.f32 %v455, %v453
        %v457 = vrot.slane %v456, 4
        %v458 = vadd.f32 %v456, %v457
        %v459 = vrot.slane %v458, 2
        %v460 = vadd.f32 %v458, %v459
        %v461 = vrot.slane %v460, 1
        %v462 = vadd.f32 %v460, %v461
        %v463 = vadd.f32 %v345, %v449
        %v464 = vadd.f32 %v358, %v462
        %s465 = scalar_lea.vmem [#allocation5], 64
        %v466 = vld [vmem:[%s465] sm:$0xf]
        %v467 = vld [vmem:[%s465 + $0x4] sm:$0xf]
        %v468 = vld [vmem:[%s465 + $0x8] sm:$0xf]
        %v469 = vld [vmem:[%s465 + $0xc] sm:$0xf]
        %v470 = vld [vmem:[%s465 + $0x10] sm:$0xf]
        %v471 = vld [vmem:[%s465 + $0x14] sm:$0xf]
        %v472 = vld [vmem:[%s465 + $0x18] sm:$0xf]
        %v473 = vld [vmem:[%s465 + $0x1c] sm:$0xf]
        %v482 = vunpack.c.l.b16 %v466
        %v483 = vunpack.c.l.b16 %v467
        %v484 = vunpack.c.l.b16 %v468
        %v485 = vunpack.c.l.b16 %v469
        %v486 = vunpack.c.l.b16 %v470
        %v487 = vunpack.c.l.b16 %v471
        %v488 = vunpack.c.l.b16 %v472
        %v489 = vunpack.c.l.b16 %v473
        %v490 = vpack.c.b16 %v483, %v482
        %v491 = vpack.c.b16 %v485, %v484
        %v492 = vpack.c.b16 %v487, %v486
        %v493 = vpack.c.b16 %v489, %v488
        %498 = vmatprep.subr.bf16.mxu0 0
        %499 = vmatpush1.bf16.msra.mxu0 %v490
        %500 = vmatprep.subr.bf16.mxu0 0
        %501 = vmatpush1.bf16.msra.mxu0 %v491
        %502 = vmatprep.subr.bf16.mxu0 0
        %503 = vmatpush1.bf16.msra.mxu0 %v492
        %504 = vmatprep.subr.bf16.mxu0 0
        %505 = vmatpush1.bf16.msra.mxu0 %v493
        %506 = vmatprep.subr.bf16.mxu0 0
        %507 = vmatpush1.bf16.msra.mxu0 0
        %508 = vmatprep.subr.bf16.mxu0 0
        %509 = vmatpush1.bf16.msra.mxu0 0
        %510 = vmatprep.subr.bf16.mxu0 0
        %511 = vmatpush1.bf16.msra.mxu0 0
        %512 = vmatprep.subr.bf16.mxu0 0
        %513 = vmatpush1.bf16.msra.mxu0 0
        %514 = vmatprep.subr.bf16.mxu0 0
        %515 = vmatpush1.bf16.msra.mxu0 0
        %516 = vmatprep.subr.bf16.mxu0 0
        %517 = vmatpush1.bf16.msra.mxu0 0
        %518 = vmatprep.subr.bf16.mxu0 0
        %519 = vmatpush1.bf16.msra.mxu0 0
        %520 = vmatprep.subr.bf16.mxu0 0
        %521 = vmatpush1.bf16.msra.mxu0 0
        %522 = vmatprep.subr.bf16.mxu0 0
        %523 = vmatpush1.bf16.msra.mxu0 0
        %524 = vmatprep.subr.bf16.mxu0 0
        %525 = vmatpush1.bf16.msra.mxu0 0
        %526 = vmatprep.subr.bf16.mxu0 0
        %527 = vmatpush1.bf16.msra.mxu0 0
        %528 = vmatprep.subr.bf16.mxu0 0
        %529 = vmatpush1.bf16.msra.mxu0 0
        %530 = vmatprep.mubr.bf16.mxu0 0
        %531 = vmatmul.mubr.bf16.gmra.mrb[0].mxu0 %v283
        %v532 = vpop.f32.mrb[0].mxu0
        %v533 = vadd.f32 0.0, %v532
        %v534 = vpop.f32.mrb[0].mxu0
        %v535 = vpop.f32.mrb[0].mxu0
        %v536 = vadd.f32 0.0, %v535
        %v537 = vpop.f32.mrb[0].mxu0
        %538 = vmatprep.mubr.bf16.mxu0 0
        %539 = vmatmul.mubr.bf16.gmra.mrb[0].mxu0 %v286
        %v540 = vpop.f32.mrb[0].mxu0
        %v541 = vadd.f32 0.0, %v540
        %v542 = vpop.f32.mrb[0].mxu0
        %v543 = vpop.f32.mrb[0].mxu0
        %v544 = vadd.f32 0.0, %v543
        %v545 = vpop.f32.mrb[0].mxu0
        %546 = vdwg.mxu0
        %v547 = vadd.f32 %v533, %v536
        %v548 = vadd.f32 %v547, %v541
        %v549 = vadd.f32 %v548, %v544
        %v550 = vrot.slane %v549, 4
        %v551 = vadd.f32 %v549, %v550
        %v552 = vrot.slane %v551, 2
        %v553 = vadd.f32 %v551, %v552
        %v554 = vrot.slane %v553, 1
        %v555 = vadd.f32 %v553, %v554
        %v556 = vmul.f32 %v533, %v533
        %v557 = vmul.f32 %v536, %v536
        %v558 = vmul.f32 %v541, %v541
        %v559 = vmul.f32 %v544, %v544
        %v560 = vadd.f32 %v556, %v557
        %v561 = vadd.f32 %v560, %v558
        %v562 = vadd.f32 %v561, %v559
        %v563 = vrot.slane %v562, 4
        %v564 = vadd.f32 %v562, %v563
        %v565 = vrot.slane %v564, 2
        %v566 = vadd.f32 %v564, %v565
        %v567 = vrot.slane %v566, 1
        %v568 = vadd.f32 %v566, %v567
        %v569 = vadd.f32 %v463, %v555
        %v570 = vadd.f32 %v464, %v568
        %s571 = scalar_lea.vmem [#allocation5], 96
        %v572 = vld [vmem:[%s571] sm:$0xf]
        %v573 = vld [vmem:[%s571 + $0x4] sm:$0xf]
        %v574 = vld [vmem:[%s571 + $0x8] sm:$0xf]
        %v575 = vld [vmem:[%s571 + $0xc] sm:$0xf]
        %v576 = vld [vmem:[%s571 + $0x10] sm:$0xf]
        %v577 = vld [vmem:[%s571 + $0x14] sm:$0xf]
        %v578 = vld [vmem:[%s571 + $0x18] sm:$0xf]
        %v579 = vld [vmem:[%s571 + $0x1c] sm:$0xf]
        %v588 = vunpack.c.l.b16 %v572
        %v589 = vunpack.c.l.b16 %v573
        %v590 = vunpack.c.l.b16 %v574
        %v591 = vunpack.c.l.b16 %v575
        %v592 = vunpack.c.l.b16 %v576
        %v593 = vunpack.c.l.b16 %v577
        %v594 = vunpack.c.l.b16 %v578
        %v595 = vunpack.c.l.b16 %v579
        %v596 = vpack.c.b16 %v589, %v588
        %v597 = vpack.c.b16 %v591, %v590
        %v598 = vpack.c.b16 %v593, %v592
        %v599 = vpack.c.b16 %v595, %v594
        %604 = vmatprep.subr.bf16.mxu0 0
        %605 = vmatpush1.bf16.msra.mxu0 %v596
        %606 = vmatprep.subr.bf16.mxu0 0
        %607 = vmatpush1.bf16.msra.mxu0 %v597
        %608 = vmatprep.subr.bf16.mxu0 0
        %609 = vmatpush1.bf16.msra.mxu0 %v598
        %610 = vmatprep.subr.bf16.mxu0 0
        %611 = vmatpush1.bf16.msra.mxu0 %v599
        %612 = vmatprep.subr.bf16.mxu0 0
        %613 = vmatpush1.bf16.msra.mxu0 0
        %614 = vmatprep.subr.bf16.mxu0 0
        %615 = vmatpush1.bf16.msra.mxu0 0
        %616 = vmatprep.subr.bf16.mxu0 0
        %617 = vmatpush1.bf16.msra.mxu0 0
        %618 = vmatprep.subr.bf16.mxu0 0
        %619 = vmatpush1.bf16.msra.mxu0 0
        %620 = vmatprep.subr.bf16.mxu0 0
        %621 = vmatpush1.bf16.msra.mxu0 0
        %622 = vmatprep.subr.bf16.mxu0 0
        %623 = vmatpush1.bf16.msra.mxu0 0
        %624 = vmatprep.subr.bf16.mxu0 0
        %625 = vmatpush1.bf16.msra.mxu0 0
        %626 = vmatprep.subr.bf16.mxu0 0
        %627 = vmatpush1.bf16.msra.mxu0 0
        %628 = vmatprep.subr.bf16.mxu0 0
        %629 = vmatpush1.bf16.msra.mxu0 0
        %630 = vmatprep.subr.bf16.mxu0 0
        %631 = vmatpush1.bf16.msra.mxu0 0
        %632 = vmatprep.subr.bf16.mxu0 0
        %633 = vmatpush1.bf16.msra.mxu0 0
        %634 = vmatprep.subr.bf16.mxu0 0
        %635 = vmatpush1.bf16.msra.mxu0 0
        %636 = vmatprep.mubr.bf16.mxu0 0
        %637 = vmatmul.mubr.bf16.gmra.mrb[0].mxu0 %v283
        %v638 = vpop.f32.mrb[0].mxu0
        %v639 = vadd.f32 0.0, %v638
        %v640 = vpop.f32.mrb[0].mxu0
        %v641 = vpop.f32.mrb[0].mxu0
        %v642 = vadd.f32 0.0, %v641
        %v643 = vpop.f32.mrb[0].mxu0
        %644 = vmatprep.mubr.bf16.mxu0 0
        %645 = vmatmul.mubr.bf16.gmra.mrb[0].mxu0 %v286
        %v646 = vpop.f32.mrb[0].mxu0
        %v647 = vadd.f32 0.0, %v646
        %v648 = vpop.f32.mrb[0].mxu0
        %v649 = vpop.f32.mrb[0].mxu0
        %v650 = vadd.f32 0.0, %v649
        %v651 = vpop.f32.mrb[0].mxu0
        %652 = vdwg.mxu0
        %v653 = vadd.f32 %v639, %v642
        %v654 = vadd.f32 %v653, %v647
        %v655 = vadd.f32 %v654, %v650
        %v656 = vrot.slane %v655, 4
        %v657 = vadd.f32 %v655, %v656
        %v658 = vrot.slane %v657, 2
        %v659 = vadd.f32 %v657, %v658
        %v660 = vrot.slane %v659, 1
        %v661 = vadd.f32 %v659, %v660
        %v662 = vmul.f32 %v639, %v639
        %v663 = vmul.f32 %v642, %v642
        %v664 = vmul.f32 %v647, %v647
        %v665 = vmul.f32 %v650, %v650
        %v666 = vadd.f32 %v662, %v663
        %v667 = vadd.f32 %v666, %v664
        %v668 = vadd.f32 %v667, %v665
        %v669 = vrot.slane %v668, 4
        %v670 = vadd.f32 %v668, %v669
        %v671 = vrot.slane %v670, 2
        %v672 = vadd.f32 %v670, %v671
        %v673 = vrot.slane %v672, 1
        %v674 = vadd.f32 %v672, %v673
        %v675 = vadd.f32 %v569, %v661
        %v676 = vadd.f32 %v570, %v674
        %677 = vst [vmem:[%s226] sm:$0x1] %v675
        %678 = vst [vmem:[%s232] sm:$0x1] %v676
        %s679 = sand.u32 %s96, 1
        %s680 = scalar_lea.sflag [#allocation4], %s679
        %s681 = sand.u32 %s96, 1
        %s682 = scalar_lea.vmem [#allocation7], %s681
        %s683 = sand.u32 %s124, 1
        %s684 = scalar_lea.sflag [#allocation9], %s683
        %s685 = sand.u32 %s124, 1
        %s686 = scalar_lea.vmem [#allocation8], %s685
        // Predicated region
        $region37: #{tpu_custom_call.1} parent=27 // pred_check
          %p687 = pneg %p106
        $region38: #{tpu_custom_call.1} parent=27 // pred_check_branch
          %689 = sbr.rel (%p687) target = $region40
        $region39: #{tpu_custom_call.1} parent=27 // pred_region
          %s691 = ssub.s32 16, 16
          %692 = vsyncadd %s680, %s691
          %s693 = smul.addr %s29, 2
          %s694 = sadd.s32 %s30, %s693
          %s695 = smul.addr %s694, 16
          %s696 = scalar_lea.hbm %s2, %s695
          %s698 = sshll.u32 %s682, 4
          %s699 = int_to_ptr.vmem [resolvable:$true] %s698
          %701 = dma.vmem_to_hbm [thread:$0]  %s699, 16, %s696, %s680
        $region40: #{tpu_custom_call.1} parent=27 // pred_fallthru
          _
        // Predicated region
        $region41: #{tpu_custom_call.1} parent=27 // pred_check
          %p702 = pneg %p134
        $region42: #{tpu_custom_call.1} parent=27 // pred_check_branch
          %704 = sbr.rel (%p702) target = $region44
        $region43: #{tpu_custom_call.1} parent=27 // pred_region
          %s706 = ssub.s32 16, 16
          %707 = vsyncadd %s684, %s706
          %s708 = smul.addr %s29, 2
          %s709 = sadd.s32 %s30, %s708
          %s710 = smul.addr %s709, 16
          %s711 = scalar_lea.hbm %s3, %s710
          %s713 = sshll.u32 %s686, 4
          %s714 = int_to_ptr.vmem [resolvable:$true] %s713
          %716 = dma.vmem_to_hbm [thread:$0]  %s714, 16, %s711, %s684
        $region44: #{tpu_custom_call.1} parent=27 // pred_fallthru
          _
      $region28: #{tpu_custom_call.1} parent=5 // pred_fallthru
        _
      %p717 = scmp.le.s32.totalorder 2, %s20
      // Predicated region
      $region45: #{tpu_custom_call.1} parent=5 // pred_check
        %p718 = pneg %p717
      $region46: #{tpu_custom_call.1} parent=5 // pred_check_branch
        %720 = sbr.rel (%p718) target = $region48
      $region47: #{tpu_custom_call.1} parent=5 // pred_region
        %s721 = ssub.s32 %s20, 2
        // Predicated region
        $region49: #{tpu_custom_call.1} parent=47 // pred_check
          %p722 = pneg %p112
        $region50: #{tpu_custom_call.1} parent=47 // pred_check_branch
          %724 = sbr.rel (%p722) target = $region52
        $region51: #{tpu_custom_call.1} parent=47 // pred_region
          %s725 = sand.u32 %s97, 1
          %s726 = scalar_lea.sflag [#allocation4], %s725
          %s727 = sand.u32 %s97, 1
          %s728 = scalar_lea.vmem [#allocation7], %s727
          %729 = dma.done %s726, 16
        $region52: #{tpu_custom_call.1} parent=47 // pred_fallthru
          _
        // Predicated region
        $region53: #{tpu_custom_call.1} parent=47 // pred_check
          %p730 = pneg %p140
        $region54: #{tpu_custom_call.1} parent=47 // pred_check_branch
          %732 = sbr.rel (%p730) target = $region56
        $region55: #{tpu_custom_call.1} parent=47 // pred_region
          %s733 = sand.u32 %s125, 1
          %s734 = scalar_lea.sflag [#allocation9], %s733
          %s735 = sand.u32 %s125, 1
          %s736 = scalar_lea.vmem [#allocation8], %s735
          %737 = dma.done %s734, 16
        $region56: #{tpu_custom_call.1} parent=47 // pred_fallthru
          _
      $region48: #{tpu_custom_call.1} parent=5 // pred_fallthru
        _
    $region6: #{tpu_custom_call.1} parent=1 // loop_footer
      %s24 = sadd.s32 1, %s20
    $region7: #{tpu_custom_call.1} parent=1 // loop_footer_branch
      %19 = sbr.rel target = $region3
    $region8: #{tpu_custom_call.1} parent=1 // loop_exit
      _
    %738 = vsyncpa [#allocation3], 1
    %s739 = scalar_lea.sflag [#allocation3], 1
    %740 = vsyncpa %s739, 1
    %741 = vsyncpa [#allocation6], 1
    %742 = vsyncpa [#allocation4], 1
    %s743 = scalar_lea.sflag [#allocation4], 1
    %744 = vsyncpa %s743, 1
    %745 = vsyncpa [#allocation9], 1
    %s746 = scalar_lea.sflag [#allocation9], 1
    %747 = vsyncpa %s746, 1

</llo_original>
